<compile_context>
chip_gen: v7x
topology: tpu7x:2x2x1
jax: 0.10.0
libtpu: 0.0.40
codegen_flags: <defaults>
</compile_context>

<pallas_src>
import functools

import jax
import jax.numpy as jnp
from jax.experimental import pallas as pl
from jax.experimental.pallas import tpu as pltpu


def _contact_head_kernel(mrow_ref, mcol_ref, attn_ref, w_ref, out_ref,
                         acc_ref, u_ref, v_ref, *, tc, cg):
    """One (batch, channel-group, channel-tile) grid step.

    mrow_ref: (1, T) f32 VMEM   keep mask (EOS mask + BOS/EOS trim), row form
    mcol_ref: (T, 1) f32 VMEM   same mask, column form
    attn_ref: (tc, T, T) VMEM   channel tile, native dtype
    w_ref:    (C,)  f32 SMEM    regression weights
    out_ref:  (T, T) f32 VMEM   per-group partial logits (written on last tile)
    acc_ref:  (T, T) f32 VMEM   scratch: Y = sum_c w_c * x_c, resident across tiles
    u_ref:    (cg, T) f32 VMEM  scratch: masked row-sums a1_c of sym_c
    v_ref:    (cg, T) f32 VMEM  scratch: (w_c / a12_c) * a1_c
    """
    g = pl.program_id(1)
    ct = pl.program_id(2)

    @pl.when(ct == 0)
    def _init():
        acc_ref[...] = jnp.zeros_like(acc_ref)

    m_row = mrow_ref[...]                                 # (1, T)
    m_col = mcol_ref[...]                                 # (T, 1)

    for c in range(tc):                                   # short static unroll
        lc = ct * tc + c                                  # channel index within group
        gch = g * cg + lc                                 # global channel (SMEM read)
        w_c = w_ref[gch]
        x = attn_ref[c].astype(jnp.float32)               # full aligned (T, T) plane

        # plane term: only a weighted accumulate; symmetrize + mask happen once
        # per group in the finalize.
        acc_ref[...] += w_c * x

        # masked row/col sums of the raw plane (mask2 is never materialized):
        # a1_c[i] = m_i * ( (x @ m)[i] + (m @ x)[i] ) = rowsum_i(mask2 * sym_c)
        rv = jnp.sum(x * m_row, axis=1, keepdims=True)    # (T, 1)  = x @ m
        cv = jnp.sum(x * m_col, axis=0, keepdims=True)    # (1, T)  = m @ x
        a1 = (jnp.transpose(rv) + cv) * m_row             # (1, T)
        a12 = jnp.sum(a1)
        # NOTE: reference would produce inf/nan when a channel's masked sum is
        # exactly zero (fully-masked channel); we guard so it contributes 0.
        denom = jnp.where(a12 != 0.0, a12, 1.0)
        u_ref[pl.ds(lc, 1), :] = a1
        v_ref[pl.ds(lc, 1), :] = (w_c / denom) * a1

    @pl.when(ct == pl.num_programs(2) - 1)
    def _finalize():
        y = acc_ref[...]
        plane = (y + jnp.transpose(y)) * m_row * m_col    # one transpose + mask / group
        # summed APC correction: sum_c (w_c/a12_c) a1_c a1_c^T as one MXU matmul
        corr = jax.lax.dot_general(
            u_ref[...], v_ref[...],
            dimension_numbers=(((0,), (0,)), ((), ())),
            preferred_element_type=jnp.float32)
        out_ref[...] = plane - corr


def _largest_divisor_leq(n, k):
    k = int(max(1, min(k, n)))
    for d in range(k, 0, -1):
        if n % d == 0:
            return d
    return 1


def contact_prediction_head(tokens, attentions, weight, bias,
                            prepend_bos=True, append_eos=True, eos_idx=2,
                            channel_tile=8, core_groups=None):
    """Mirrors ContactPredictionHead.forward.

    tokens:     (B, T) int32
    attentions: (B, L, H, T, T) float (any dtype; kept native through the DMA)
    returns:    (B, S, S) float32, S = T - prepend_bos - append_eos
    """
    B, L, H, T, _ = attentions.shape
    C = L * H
    r0 = 1 if prepend_bos else 0
    S = T - r0 - (1 if append_eos else 0)

    # Contiguous (L,H) -> C merge: metadata-only reshape, native dtype, no HBM copy.
    attn = attentions.reshape(B, C, T, T)

    # Keep mask over the full T axis: EOS positions plus the BOS/EOS trim are all
    # folded into one per-position mask, so the kernel never does an unaligned
    # (offset-1) window slice — it works on the full (8,128)-aligned (T,T) plane
    # and the trimmed (S,S) window is sliced from the output in JAX.
    if append_eos:
        keep = (tokens != eos_idx).astype(jnp.float32)     # (B, T)
    else:
        keep = jnp.ones((B, T), jnp.float32)
    pos = jnp.arange(T)
    window = ((pos >= r0) & (pos < r0 + S)).astype(jnp.float32)
    keep = keep * window[None, :]
    m_row = keep.reshape(B, 1, T)
    m_col = keep.reshape(B, T, 1)

    # Channel groups: a second 'parallel' grid axis so small-batch runs can use
    # both TensorCores on v7x; partial logits are summed in a tiny JAX epilogue.
    if core_groups is None:
        core_groups = 2
    G = _largest_divisor_leq(C, core_groups)
    Cg = C // G

    # Channel tile: largest divisor of Cg that fits the per-chip VMEM budget
    # (no HBM-side channel padding is ever performed; worst case tc = 1).
    itemsize = jnp.dtype(attn.dtype).itemsize
    try:
        vmem_phys = int(pltpu.get_tpu_info().vmem_capacity_bytes)  # 64 MiB v7x / 128 MiB v5e,v6e
    except Exception:
        vmem_phys = 64 << 20                                       # conservative fallback
    budget = (vmem_phys * 3) // 4
    plane = T * T * 4
    # out block (x2 buffers) + acc scratch + ~3 planes of in-kernel f32
    # temporaries + two (Cg,T) row-sum stashes + headroom.
    fixed = 6 * plane + 2 * Cg * T * 4 + (2 << 20)
    tc_cap = max(1, (budget - fixed) // (2 * T * T * itemsize))
    tc = _largest_divisor_leq(Cg, min(int(channel_tile), int(tc_cap)))
    ctg = Cg // tc

    w = weight.astype(jnp.float32).reshape(C)

    vmem_limit = int(max(16 << 20,
                         min(budget, fixed + 2 * tc * T * T * itemsize + (4 << 20))))

    kernel = functools.partial(_contact_head_kernel, tc=tc, cg=Cg)

    # TODO(synk): for production T not a multiple of 128, pad the logit plane to a
    # lane-dense width in the finalize store (output traffic is << the attention
    # read here, so it is left unpadded).
    partials = pl.pallas_call(
        kernel,
        out_shape=jax.ShapeDtypeStruct((B, G, T, T), jnp.float32),
        grid=(B, G, ctg),
        in_specs=[
            pl.BlockSpec((None, 1, T), lambda b, g, ct: (b, 0, 0)),          # mask row
            pl.BlockSpec((None, T, 1), lambda b, g, ct: (b, 0, 0)),          # mask col
            pl.BlockSpec((None, tc, T, T),
                         lambda b, g, ct: (b, g * ctg + ct, 0, 0)),          # attn tile
            pl.BlockSpec(memory_space=pltpu.MemorySpace.SMEM),               # weights
        ],
        out_specs=pl.BlockSpec((None, None, T, T), lambda b, g, ct: (b, g, 0, 0)),
        scratch_shapes=[
            pltpu.VMEM((T, T), jnp.float32),      # Y accumulator
            pltpu.VMEM((Cg, T), jnp.float32),     # a1 stash
            pltpu.VMEM((Cg, T), jnp.float32),     # (w/a12)*a1 stash
        ],
        compiler_params=pltpu.CompilerParams(
            dimension_semantics=("parallel", "parallel", "arbitrary"),
            vmem_limit_bytes=vmem_limit),
    )(m_row, m_col, attn, w)

    # Tiny epilogue: sum the per-group partial logits, add bias, sigmoid, trim.
    b0 = jnp.asarray(bias, jnp.float32).reshape(())
    logits = jnp.sum(partials, axis=1) + b0
    return jax.nn.sigmoid(logits)[:, r0:r0 + S, r0:r0 + S]


def _reference(tokens, attentions, weight, bias,
               prepend_bos=True, append_eos=True, eos_idx=2):
    """Pure-JAX port of the PyTorch module, for correctness checking."""
    B, L, H, T, _ = attentions.shape
    attn = attentions.astype(jnp.float32)
    if append_eos:
        m = (tokens != eos_idx).astype(attn.dtype)
        m2 = m[:, None, :] * m[:, :, None]
        attn = attn * m2[:, None, None, :, :]
        attn = attn[..., :-1, :-1]
    if prepend_bos:
        attn = attn[..., 1:, 1:]
    S = attn.shape[-1]
    attn = attn.reshape(B, L * H, S, S)
    sym = attn + jnp.swapaxes(attn, -1, -2)
    a1 = sym.sum(-1, keepdims=True)
    a2 = sym.sum(-2, keepdims=True)
    a12 = sym.sum((-1, -2), keepdims=True)
    norm = sym - a1 * a2 / a12
    norm = jnp.transpose(norm, (0, 2, 3, 1))                 # (B, S, S, C)
    logits = jnp.einsum("bijc,c->bij", norm, weight) + bias
    return jax.nn.sigmoid(logits)


if __name__ == "__main__":
    key = jax.random.PRNGKey(0)
    k_tok, k_attn, k_w, k_b = jax.random.split(key, 4)

    B, L, H, T = 2, 2, 4, 10          # in_features = L*H = 8, S = 10 - 2 = 8
    eos_idx = 2
    in_features = L * H

    tokens = jax.random.randint(k_tok, (B, T), 4, 20, dtype=jnp.int32)
    tokens = tokens.at[:, -1].set(eos_idx)     # eos at the end
    tokens = tokens.at[0, 7].set(eos_idx)      # in-window eos to exercise masking
    attentions = jax.random.normal(k_attn, (B, L, H, T, T), dtype=jnp.float32)

    # deterministic Linear(in_features, 1, bias=True) params (PyTorch-style uniform)
    bound = 1.0 / (in_features ** 0.5)
    weight = jax.random.uniform(k_w, (in_features,), jnp.float32, -bound, bound)
    bias = jax.random.uniform(k_b, (), jnp.float32, -bound, bound)

    # channel_tile=2 -> 2 groups x 2 channel-tiles: exercises both the resident
    # accumulator across the 'arbitrary' axis and the group-parallel axis.
    out = contact_prediction_head(tokens, attentions, weight, bias,
                                  prepend_bos=True, append_eos=True,
                                  eos_idx=eos_idx, channel_tile=2)
    out = jax.block_until_ready(out)

    ref = _reference(tokens, attentions, weight, bias,
                     prepend_bos=True, append_eos=True, eos_idx=eos_idx)
    assert out.shape == (B, T - 2, T - 2)
    assert jnp.allclose(out, ref, atol=1e-4, rtol=1e-4), "mismatch vs reference"

    print("KERNEL_OK")
</pallas_src>

<mosaic_0001>
module attributes {stable_mosaic.version = 11 : i64} {
  func.func @_contact_head_kernel(%arg0: i32, %arg1: i32, %arg2: i32, %arg3: memref<1x1x10xf32, #tpu.memory_space<vmem>>, %arg4: memref<1x10x1xf32, #tpu.memory_space<vmem>>, %arg5: memref<1x2x10x10xf32, #tpu.memory_space<vmem>>, %arg6: memref<8xf32, #tpu.memory_space<smem>>, %arg7: memref<1x1x10x10xf32, #tpu.memory_space<vmem>>, %arg8: memref<10x10xf32, #tpu.memory_space<vmem>>, %arg9: memref<4x10xf32, #tpu.memory_space<vmem>>, %arg10: memref<4x10xf32, #tpu.memory_space<vmem>>) attributes {dimension_semantics = [#tpu.dimension_semantics<parallel>, #tpu.dimension_semantics<parallel>, #tpu.dimension_semantics<arbitrary>], iteration_bounds = array<i64: 2, 2, 2>, scalar_prefetch = 0 : i64, scratch_operands = 3 : i64, tpu.core_type = #tpu.core_type<tc>, window_params = [{transform_indices = @transform_0, window_bounds = array<i64: 1, 1, 10>}, {transform_indices = @transform_1, window_bounds = array<i64: 1, 10, 1>}, {transform_indices = @transform_2, window_bounds = array<i64: 1, 2, 10, 10>}, {transform_indices = @transform_3, window_bounds = array<i64: 8>}, {transform_indices = @transform_4, window_bounds = array<i64: 1, 1, 10, 10>}]} {
    %c0_i32 = arith.constant 0 : i32
    %0 = arith.cmpi eq, %arg2, %c0_i32 : i32
    %1 = arith.extui %0 : i1 to i32
    %c0_i32_0 = arith.constant 0 : i32
    %2 = arith.cmpi ne, %1, %c0_i32_0 : i32
    scf.if %2 {
      %cst_39 = arith.constant 0.000000e+00 : f32
      %84 = vector.broadcast %cst_39 : f32 to vector<10x10xf32>
      %c0_40 = arith.constant 0 : index
      %c0_41 = arith.constant 0 : index
      %85 = vector.load %arg8[%c0_40, %c0_41] : memref<10x10xf32, #tpu.memory_space<vmem>>, vector<10x10xf32>
      tpu.vector_store %arg8[%c0_40, %c0_41], %84 {strides = array<i32>} : memref<10x10xf32, #tpu.memory_space<vmem>>, vector<10x10xf32>,
    } else {
    }
    %c0 = arith.constant 0 : index
    %c0_1 = arith.constant 0 : index
    %c0_2 = arith.constant 0 : index
    %3 = vector.load %arg3[%c0, %c0_1, %c0_2] : memref<1x1x10xf32, #tpu.memory_space<vmem>>, vector<1x1x10xf32>
    %4 = vector.shape_cast %3 : vector<1x1x10xf32> to vector<1x10xf32>
    %c0_3 = arith.constant 0 : index
    %c0_4 = arith.constant 0 : index
    %c0_5 = arith.constant 0 : index
    %5 = vector.load %arg4[%c0_3, %c0_4, %c0_5] : memref<1x10x1xf32, #tpu.memory_space<vmem>>, vector<1x10x1xf32>
    %6 = vector.shape_cast %5 : vector<1x10x1xf32> to vector<10x1xf32>
    %c2_i32 = arith.constant 2 : i32
    %7 = arith.muli %arg2, %c2_i32 : i32
    %c0_i32_6 = arith.constant 0 : i32
    %8 = arith.addi %7, %c0_i32_6 : i32
    %c4_i32 = arith.constant 4 : i32
    %9 = arith.muli %arg1, %c4_i32 : i32
    %10 = arith.addi %9, %8 : i32
    %11 = arith.index_cast %10 : i32 to index
    %12 = memref.load %arg6[%11] : memref<8xf32, #tpu.memory_space<smem>>
    %c0_7 = arith.constant 0 : index
    %c0_8 = arith.constant 0 : index
    %c0_9 = arith.constant 0 : index
    %c0_10 = arith.constant 0 : index
    %13 = vector.load %arg5[%c0_7, %c0_8, %c0_9, %c0_10] : memref<1x2x10x10xf32, #tpu.memory_space<vmem>>, vector<1x1x10x10xf32>
    %14 = vector.shape_cast %13 : vector<1x1x10x10xf32> to vector<10x10xf32>
    %c0_11 = arith.constant 0 : index
    %c0_12 = arith.constant 0 : index
    %15 = vector.load %arg8[%c0_11, %c0_12] : memref<10x10xf32, #tpu.memory_space<vmem>>, vector<10x10xf32>
    %16 = vector.broadcast %12 : f32 to vector<10x10xf32>
    %17 = arith.mulf %16, %14 : vector<10x10xf32>
    %18 = arith.addf %15, %17 : vector<10x10xf32>
    %c0_13 = arith.constant 0 : index
    %c0_14 = arith.constant 0 : index
    %19 = vector.load %arg8[%c0_13, %c0_14] : memref<10x10xf32, #tpu.memory_space<vmem>>, vector<10x10xf32>
    tpu.vector_store %arg8[%c0_13, %c0_14], %18 {strides = array<i32>} : memref<10x10xf32, #tpu.memory_space<vmem>>, vector<10x10xf32>,
    %20 = vector.broadcast %4 : vector<1x10xf32> to vector<10x10xf32>
    %21 = arith.mulf %14, %20 : vector<10x10xf32>
    %cst = arith.constant dense<0.000000e+00> : vector<10xf32>
    %22 = vector.multi_reduction <add>, %21, %cst [1] : vector<10x10xf32> to vector<10xf32>
    %23 = vector.shape_cast %22 : vector<10xf32> to vector<10x1xf32>
    %24 = vector.broadcast %6 : vector<10x1xf32> to vector<10x10xf32>
    %25 = arith.mulf %14, %24 : vector<10x10xf32>
    %cst_15 = arith.constant dense<0.000000e+00> : vector<10xf32>
    %26 = vector.multi_reduction <add>, %25, %cst_15 [0] : vector<10x10xf32> to vector<10xf32>
    %27 = vector.shape_cast %26 : vector<10xf32> to vector<1x10xf32>
    %28 = tpu.transpose %23, [1, 0] : vector<10x1xf32> -> vector<1x10xf32>
    %29 = arith.addf %28, %27 : vector<1x10xf32>
    %30 = arith.mulf %29, %4 : vector<1x10xf32>
    %31 = vector.shape_cast %30 : vector<1x10xf32> to vector<1x1x10xf32>
    %cst_16 = arith.constant dense<0.000000e+00> : vector<1xf32>
    %32 = vector.multi_reduction <add>, %31, %cst_16 [1, 2] : vector<1x1x10xf32> to vector<1xf32>
    %33 = vector.shape_cast %32 : vector<1xf32> to vector<1x1x1xf32>
    %34 = vector.extract %33[0, 0, 0] : f32 from vector<1x1x1xf32>
    %cst_17 = arith.constant 0.000000e+00 : f32
    %35 = arith.cmpf one, %34, %cst_17 : f32
    %cst_18 = arith.constant 1.000000e+00 : f32
    %36 = arith.select %35, %34, %cst_18 : f32
    %37 = arith.index_cast %8 : i32 to index
    %c0_19 = arith.constant 0 : index
    %38 = vector.load %arg9[%37, %c0_19] : memref<4x10xf32, #tpu.memory_space<vmem>>, vector<1x10xf32>
    tpu.vector_store %arg9[%37, %c0_19], %30 {strides = array<i32>} : memref<4x10xf32, #tpu.memory_space<vmem>>, vector<1x10xf32>,
    %39 = arith.divf %12, %36 : f32
    %40 = vector.broadcast %39 : f32 to vector<1x10xf32>
    %41 = arith.mulf %40, %30 : vector<1x10xf32>
    %42 = arith.index_cast %8 : i32 to index
    %c0_20 = arith.constant 0 : index
    %43 = vector.load %arg10[%42, %c0_20] : memref<4x10xf32, #tpu.memory_space<vmem>>, vector<1x10xf32>
    tpu.vector_store %arg10[%42, %c0_20], %41 {strides = array<i32>} : memref<4x10xf32, #tpu.memory_space<vmem>>, vector<1x10xf32>,
    %c2_i32_21 = arith.constant 2 : i32
    %44 = arith.muli %arg2, %c2_i32_21 : i32
    %c1_i32 = arith.constant 1 : i32
    %45 = arith.addi %44, %c1_i32 : i32
    %c4_i32_22 = arith.constant 4 : i32
    %46 = arith.muli %arg1, %c4_i32_22 : i32
    %47 = arith.addi %46, %45 : i32
    %48 = arith.index_cast %47 : i32 to index
    %49 = memref.load %arg6[%48] : memref<8xf32, #tpu.memory_space<smem>>
    %c0_23 = arith.constant 0 : index
    %c1 = arith.constant 1 : index
    %c0_24 = arith.constant 0 : index
    %c0_25 = arith.constant 0 : index
    %50 = vector.load %arg5[%c0_23, %c1, %c0_24, %c0_25] : memref<1x2x10x10xf32, #tpu.memory_space<vmem>>, vector<1x1x10x10xf32>
    %51 = vector.shape_cast %50 : vector<1x1x10x10xf32> to vector<10x10xf32>
    %c0_26 = arith.constant 0 : index
    %c0_27 = arith.constant 0 : index
    %52 = vector.load %arg8[%c0_26, %c0_27] : memref<10x10xf32, #tpu.memory_space<vmem>>, vector<10x10xf32>
    %53 = vector.broadcast %49 : f32 to vector<10x10xf32>
    %54 = arith.mulf %53, %51 : vector<10x10xf32>
    %55 = arith.addf %52, %54 : vector<10x10xf32>
    %c0_28 = arith.constant 0 : index
    %c0_29 = arith.constant 0 : index
    %56 = vector.load %arg8[%c0_28, %c0_29] : memref<10x10xf32, #tpu.memory_space<vmem>>, vector<10x10xf32>
    tpu.vector_store %arg8[%c0_28, %c0_29], %55 {strides = array<i32>} : memref<10x10xf32, #tpu.memory_space<vmem>>, vector<10x10xf32>,
    %57 = vector.broadcast %4 : vector<1x10xf32> to vector<10x10xf32>
    %58 = arith.mulf %51, %57 : vector<10x10xf32>
    %cst_30 = arith.constant dense<0.000000e+00> : vector<10xf32>
    %59 = vector.multi_reduction <add>, %58, %cst_30 [1] : vector<10x10xf32> to vector<10xf32>
    %60 = vector.shape_cast %59 : vector<10xf32> to vector<10x1xf32>
    %61 = vector.broadcast %6 : vector<10x1xf32> to vector<10x10xf32>
    %62 = arith.mulf %51, %61 : vector<10x10xf32>
    %cst_31 = arith.constant dense<0.000000e+00> : vector<10xf32>
    %63 = vector.multi_reduction <add>, %62, %cst_31 [0] : vector<10x10xf32> to vector<10xf32>
    %64 = vector.shape_cast %63 : vector<10xf32> to vector<1x10xf32>
    %65 = tpu.transpose %60, [1, 0] : vector<10x1xf32> -> vector<1x10xf32>
    %66 = arith.addf %65, %64 : vector<1x10xf32>
    %67 = arith.mulf %66, %4 : vector<1x10xf32>
    %68 = vector.shape_cast %67 : vector<1x10xf32> to vector<1x1x10xf32>
    %cst_32 = arith.constant dense<0.000000e+00> : vector<1xf32>
    %69 = vector.multi_reduction <add>, %68, %cst_32 [1, 2] : vector<1x1x10xf32> to vector<1xf32>
    %70 = vector.shape_cast %69 : vector<1xf32> to vector<1x1x1xf32>
    %71 = vector.extract %70[0, 0, 0] : f32 from vector<1x1x1xf32>
    %cst_33 = arith.constant 0.000000e+00 : f32
    %72 = arith.cmpf one, %71, %cst_33 : f32
    %cst_34 = arith.constant 1.000000e+00 : f32
    %73 = arith.select %72, %71, %cst_34 : f32
    %74 = arith.index_cast %45 : i32 to index
    %c0_35 = arith.constant 0 : index
    %75 = vector.load %arg9[%74, %c0_35] : memref<4x10xf32, #tpu.memory_space<vmem>>, vector<1x10xf32>
    tpu.vector_store %arg9[%74, %c0_35], %67 {strides = array<i32>} : memref<4x10xf32, #tpu.memory_space<vmem>>, vector<1x10xf32>,
    %76 = arith.divf %49, %73 : f32
    %77 = vector.broadcast %76 : f32 to vector<1x10xf32>
    %78 = arith.mulf %77, %67 : vector<1x10xf32>
    %79 = arith.index_cast %45 : i32 to index
    %c0_36 = arith.constant 0 : index
    %80 = vector.load %arg10[%79, %c0_36] : memref<4x10xf32, #tpu.memory_space<vmem>>, vector<1x10xf32>
    tpu.vector_store %arg10[%79, %c0_36], %78 {strides = array<i32>} : memref<4x10xf32, #tpu.memory_space<vmem>>, vector<1x10xf32>,
    %c1_i32_37 = arith.constant 1 : i32
    %81 = arith.cmpi eq, %arg2, %c1_i32_37 : i32
    %82 = arith.extui %81 : i1 to i32
    %c0_i32_38 = arith.constant 0 : i32
    %83 = arith.cmpi ne, %82, %c0_i32_38 : i32
    scf.if %83 {
      %c0_39 = arith.constant 0 : index
      %c0_40 = arith.constant 0 : index
      %84 = vector.load %arg8[%c0_39, %c0_40] : memref<10x10xf32, #tpu.memory_space<vmem>>, vector<10x10xf32>
      %85 = tpu.transpose %84, [1, 0] : vector<10x10xf32> -> vector<10x10xf32>
      %86 = arith.addf %84, %85 : vector<10x10xf32>
      %87 = vector.broadcast %4 : vector<1x10xf32> to vector<10x10xf32>
      %88 = arith.mulf %86, %87 : vector<10x10xf32>
      %89 = vector.broadcast %6 : vector<10x1xf32> to vector<10x10xf32>
      %90 = arith.mulf %88, %89 : vector<10x10xf32>
      %c0_41 = arith.constant 0 : index
      %c0_42 = arith.constant 0 : index
      %91 = vector.load %arg9[%c0_41, %c0_42] : memref<4x10xf32, #tpu.memory_space<vmem>>, vector<4x10xf32>
      %c0_43 = arith.constant 0 : index
      %c0_44 = arith.constant 0 : index
      %92 = vector.load %arg10[%c0_43, %c0_44] : memref<4x10xf32, #tpu.memory_space<vmem>>, vector<4x10xf32>
      %cst_45 = arith.constant dense<0.000000e+00> : vector<10x10xf32>
      %93 = tpu.matmul %91, %92, %cst_45 {dimension_numbers = #tpu.dot_dimension_numbers<[0], [0], [1], [1], [0, 1, 1, 1], [], []>} : vector<4x10xf32>, vector<4x10xf32>, vector<10x10xf32> -> vector<10x10xf32>
      %94 = arith.subf %90, %93 : vector<10x10xf32>
      %c0_46 = arith.constant 0 : index
      %c0_47 = arith.constant 0 : index
      %c0_48 = arith.constant 0 : index
      %c0_49 = arith.constant 0 : index
      %95 = vector.load %arg7[%c0_46, %c0_47, %c0_48, %c0_49] : memref<1x1x10x10xf32, #tpu.memory_space<vmem>>, vector<1x1x10x10xf32>
      %96 = vector.shape_cast %95 : vector<1x1x10x10xf32> to vector<10x10xf32>
      %97 = vector.shape_cast %94 : vector<10x10xf32> to vector<1x1x10x10xf32>
      tpu.vector_store %arg7[%c0_46, %c0_47, %c0_48, %c0_49], %97 {strides = array<i32>} : memref<1x1x10x10xf32, #tpu.memory_space<vmem>>, vector<1x1x10x10xf32>,
    } else {
    }
    return
  }
  func.func @transform_0(%arg0: i32, %arg1: i32, %arg2: i32) -> (i32, i32, i32) {
    %c0_i32 = arith.constant 0 : i32
    %c0_i32_0 = arith.constant 0 : i32
    %c0_i32_1 = arith.constant 0 : i32
    return %arg0, %c0_i32, %c0_i32_0 : i32, i32, i32
  }
  func.func @transform_1(%arg0: i32, %arg1: i32, %arg2: i32) -> (i32, i32, i32) {
    %c0_i32 = arith.constant 0 : i32
    %c0_i32_0 = arith.constant 0 : i32
    %c0_i32_1 = arith.constant 0 : i32
    return %arg0, %c0_i32, %c0_i32_0 : i32, i32, i32
  }
  func.func @transform_2(%arg0: i32, %arg1: i32, %arg2: i32) -> (i32, i32, i32, i32) {
    %c2_i32 = arith.constant 2 : i32
    %0 = arith.muli %arg1, %c2_i32 : i32
    %1 = arith.addi %0, %arg2 : i32
    %c0_i32 = arith.constant 0 : i32
    %c0_i32_0 = arith.constant 0 : i32
    %c0_i32_1 = arith.constant 0 : i32
    return %arg0, %1, %c0_i32, %c0_i32_0 : i32, i32, i32, i32
  }
  func.func @transform_3(%arg0: i32, %arg1: i32, %arg2: i32) -> i32 {
    %c0_i32 = arith.constant 0 : i32
    %c0_i32_0 = arith.constant 0 : i32
    return %c0_i32 : i32
  }
  func.func @transform_4(%arg0: i32, %arg1: i32, %arg2: i32) -> (i32, i32, i32, i32) {
    %c0_i32 = arith.constant 0 : i32
    %c0_i32_0 = arith.constant 0 : i32
    %c0_i32_1 = arith.constant 0 : i32
    return %arg0, %arg1, %c0_i32, %c0_i32_0 : i32, i32, i32, i32
  }
}

</mosaic_0001>

<llo_original>
// kernel: tpu_custom_call.1
$region0: #{tpu_custom_call.1}
  #allocation0 [shape = 'u32[]', space=smem, size = 0x4, offset = 0x4, fixed_abs, tag = 'smem constant byte address 0x4 - core index']
  #allocation1 [shape = 'u32[144,128]{1,0:T(1,128)}', space=vmem, size = 0x12000, scoped, tag = 'internal scratch']
  #allocation2 [shape = 'f32[10,10]{1,0:T(8,128)}', space=vmem, size = 0x2000, scoped, tag = 'scratch operand']
  #allocation3 [shape = 'f32[4,10]{1,0:T(4,128)}', space=vmem, size = 0x800, scoped, tag = 'scratch operand']
  #allocation4 [shape = 'f32[4,10]{1,0:T(4,128)}', space=vmem, size = 0x800, scoped, tag = 'scratch operand']
  %s0 = inlined_call_operand.vmem [shape: f32[2,1,10], index: 0, kind: input, shape index: {}]
  %s1 = inlined_call_operand.vmem [shape: f32[2,10,1], index: 1, kind: input, shape index: {}]
  %s2 = inlined_call_operand.vmem [shape: f32[2,8,10,10], index: 2, kind: input, shape index: {}]
  %s3 = inlined_call_operand.vmem [shape: f32[8], index: 3, kind: input, shape index: {}]
  %s4 = inlined_call_operand.vmem [shape: f32[2,2,10,10], index: 4, kind: output, shape index: {}]
  %s5 = sld [smem:[#allocation0]]
  $region61: #{tpu_custom_call.1} parent=0
    _
  %s7 = ssub.s32 1, %s5
  %s8 = scalar_select 0, %s7, %s5
  $region1: #{tpu_custom_call.1} parent=0
    #allocation5 [shape = 'u8[512]{0}', space=smem, size = 0x200, scoped, tag = 'input window, operand 3, single buffered']
    #allocation6 [shape = 's32[2]{0}', space=sflag, size = 0x8, scoped, tag = 'scoped memory for tpu_custom_call.1']
    %9 = vsyncpa [#allocation6], 0
    loop: start=0, step=1, limit=10
    $region2: #{tpu_custom_call.1} parent=1 // loop_pre_header
      _
    $region3: #{tpu_custom_call.1} parent=1 // loop_header
      %s11 = sphi 0, %s15
      %p12 = scmp.ge.s32.totalorder %s11, 10
      %s18 = sphi 0, %s37
      %s19 = sphi 0, %s33
      %s20 = sphi 0, %s29
      %s21 = sphi 0, %s18
      %s22 = sphi 0, %s19
      %s23 = sphi 0, %s20
      %s24 = sphi 0, %s21
      %s25 = sphi 0, %s22
      %s26 = sphi 0, %s23
      %s40 = sphi 0, %s42
      %s43 = sphi 0, %s40
      %s44 = sphi 0, %s43
      %s60 = sphi 0, %s44
      %s66 = sphi 0, %s68
      %s69 = sphi 0, %s66
      %s70 = sphi 0, %s69
      %s86 = sphi 0, %s70
      %s98 = sphi 0, %s100
      %s101 = sphi 0, %s98
      %s102 = sphi 0, %s101
      %s118 = sphi 0, %s102
      %s122 = sphi 0, %s122
      %s124 = sphi 0, %s122
      %s125 = sphi 0, %s124
      %s139 = sphi 0, %s125
      %s147 = sphi 0, %s149
      %s150 = sphi 0, %s147
      %s151 = sphi 0, %s150
      %s167 = sphi 0, %s151
    $region4: #{tpu_custom_call.1} parent=1 // loop_header_branch
      %14 = sbr.rel (%p12) target = $region8
    $region5: #{tpu_custom_call.1} parent=1 // loop_body
      %s16 = ssub.s32 %s11, 1
      %s17 = ssub.s32 %s11, 2
      %s27 = sadd.s32 1, %s20
      %p28 = scmp.ge.s32.totalorder %s27, 2
      %s29 = scalar_select %p28, 0, %s27
      %s30 = sadd.s32 1, %s19
      %s31 = scalar_select %p28, %s30, %s19
      %p32 = scmp.ge.s32.totalorder %s31, 2
      %s33 = scalar_select %p32, 0, %s31
      %s34 = sadd.s32 1, %s18
      %s35 = scalar_select %p32, %s34, %s18
      %p36 = scmp.ge.s32.totalorder %s35, 2
      %s37 = scalar_select %p36, 0, %s35
      %s38 = ssub.s32 %s18, %s37
      %p39 = scmp.eq.s32.totalorder %s38, 0
      %s41 = sadd.s32 %s40, 1
      %s42 = scalar_select %p39, %s40, %s41
      %p45 = pneg %p39
      %p46 = scmp.eq.s32.totalorder %s11, 7
      %p47 = por %p45, %p46
      %p48 = scmp.ne.s32.totalorder %s40, %s43
      %p49 = scmp.eq.s32.totalorder %s11, 0
      %p50 = por %p48, %p49
      %p51 = scmp.ne.s32.totalorder %s40, %s43
      %p52 = scmp.eq.s32.totalorder %s16, 7
      %p53 = por %p51, %p52
      %p54 = scmp.ne.s32.totalorder %s43, %s44
      %p55 = scmp.eq.s32.totalorder %s16, 0
      %p56 = por %p54, %p55
      %p57 = scmp.ne.s32.totalorder %s43, %s44
      %p58 = scmp.eq.s32.totalorder %s17, 7
      %p59 = por %p57, %p58
      %p61 = scmp.ne.s32.totalorder %s44, %s60
      %p62 = scmp.eq.s32.totalorder %s17, 0
      %p63 = por %p61, %p62
      %s64 = ssub.s32 %s18, %s37
      %p65 = scmp.eq.s32.totalorder %s64, 0
      %s67 = sadd.s32 %s66, 1
      %s68 = scalar_select %p65, %s66, %s67
      %p71 = pneg %p65
      %p72 = scmp.eq.s32.totalorder %s11, 7
      %p73 = por %p71, %p72
      %p74 = scmp.ne.s32.totalorder %s66, %s69
      %p75 = scmp.eq.s32.totalorder %s11, 0
      %p76 = por %p74, %p75
      %p77 = scmp.ne.s32.totalorder %s66, %s69
      %p78 = scmp.eq.s32.totalorder %s16, 7
      %p79 = por %p77, %p78
      %p80 = scmp.ne.s32.totalorder %s69, %s70
      %p81 = scmp.eq.s32.totalorder %s16, 0
      %p82 = por %p80, %p81
      %p83 = scmp.ne.s32.totalorder %s69, %s70
      %p84 = scmp.eq.s32.totalorder %s17, 7
      %p85 = por %p83, %p84
      %p87 = scmp.ne.s32.totalorder %s70, %s86
      %p88 = scmp.eq.s32.totalorder %s17, 0
      %p89 = por %p87, %p88
      %s90 = smul.u32 %s19, 2
      %s91 = sadd.s32 %s90, %s20
      %s92 = smul.u32 %s33, 2
      %s93 = sadd.s32 %s92, %s29
      %s94 = ssub.s32 %s18, %s37
      %s95 = ssub.s32 %s91, %s93
      %s96 = sor.u32 %s94, %s95
      %p97 = scmp.eq.s32.totalorder %s96, 0
      %s99 = sadd.s32 %s98, 1
      %s100 = scalar_select %p97, %s98, %s99
      %p103 = pneg %p97
      %p104 = scmp.eq.s32.totalorder %s11, 7
      %p105 = por %p103, %p104
      %p106 = scmp.ne.s32.totalorder %s98, %s101
      %p107 = scmp.eq.s32.totalorder %s11, 0
      %p108 = por %p106, %p107
      %p109 = scmp.ne.s32.totalorder %s98, %s101
      %p110 = scmp.eq.s32.totalorder %s16, 7
      %p111 = por %p109, %p110
      %p112 = scmp.ne.s32.totalorder %s101, %s102
      %p113 = scmp.eq.s32.totalorder %s16, 0
      %p114 = por %p112, %p113
      %p115 = scmp.ne.s32.totalorder %s101, %s102
      %p116 = scmp.eq.s32.totalorder %s17, 7
      %p117 = por %p115, %p116
      %p119 = scmp.ne.s32.totalorder %s102, %s118
      %p120 = scmp.eq.s32.totalorder %s17, 0
      %p121 = por %p119, %p120
      %s123 = sadd.s32 %s122, 1
      %p126 = scmp.eq.s32.totalorder %s11, 7
      %p127 = scmp.ne.s32.totalorder %s122, %s124
      %p128 = scmp.eq.s32.totalorder %s11, 0
      %p129 = por %p127, %p128
      %p130 = scmp.ne.s32.totalorder %s122, %s124
      %p131 = scmp.eq.s32.totalorder %s16, 7
      %p132 = por %p130, %p131
      %p133 = scmp.ne.s32.totalorder %s124, %s125
      %p134 = scmp.eq.s32.totalorder %s16, 0
      %p135 = por %p133, %p134
      %p136 = scmp.ne.s32.totalorder %s124, %s125
      %p137 = scmp.eq.s32.totalorder %s17, 7
      %p138 = por %p136, %p137
      %p140 = scmp.ne.s32.totalorder %s125, %s139
      %p141 = scmp.eq.s32.totalorder %s17, 0
      %p142 = por %p140, %p141
      %s143 = ssub.s32 %s18, %s37
      %s144 = ssub.s32 %s19, %s33
      %s145 = sor.u32 %s143, %s144
      %p146 = scmp.eq.s32.totalorder %s145, 0
      %s148 = sadd.s32 %s147, 1
      %s149 = scalar_select %p146, %s147, %s148
      %p152 = pneg %p146
      %p153 = scmp.eq.s32.totalorder %s11, 7
      %p154 = por %p152, %p153
      %p155 = scmp.ne.s32.totalorder %s147, %s150
      %p156 = scmp.eq.s32.totalorder %s11, 0
      %p157 = por %p155, %p156
      %p158 = scmp.ne.s32.totalorder %s147, %s150
      %p159 = scmp.eq.s32.totalorder %s16, 7
      %p160 = por %p158, %p159
      %p161 = scmp.ne.s32.totalorder %s150, %s151
      %p162 = scmp.eq.s32.totalorder %s16, 0
      %p163 = por %p161, %p162
      %p164 = scmp.ne.s32.totalorder %s150, %s151
      %p165 = scmp.eq.s32.totalorder %s17, 7
      %p166 = por %p164, %p165
      %p168 = scmp.ne.s32.totalorder %s151, %s167
      %p169 = scmp.eq.s32.totalorder %s17, 0
      %p170 = por %p168, %p169
      %p171 = scmp.le.s32.totalorder 1, %s11
      %p172 = scmp.lt.s32.totalorder %s11, 9
      %p173 = pnand %p171, %p172
      %p174 = pneg %p173
      // Predicated region
      $region9: #{tpu_custom_call.1} parent=5 // pred_check
        _
      $region10: #{tpu_custom_call.1} parent=5 // pred_check_branch
        %176 = sbr.rel (%p173) target = $region12
      $region11: #{tpu_custom_call.1} parent=5 // pred_region
        %s177 = ssub.s32 %s11, 1
        // Predicated region
        $region13: #{tpu_custom_call.1} parent=11 // pred_check
          %p178 = pneg %p135
        $region14: #{tpu_custom_call.1} parent=11 // pred_check_branch
          %180 = sbr.rel (%p178) target = $region16
        $region15: #{tpu_custom_call.1} parent=11 // pred_region
          %s182 = ssub.s32 16, 16
          %183 = vsyncadd [#allocation6], %s182
          %s185 = sshll.u32 %s3, 4
          %s186 = int_to_ptr.vmem [resolvable:$true] %s185
          %188 = dma.vmem_to_smem %s186, 16, [#allocation5], [#allocation6]
        $region16: #{tpu_custom_call.1} parent=11 // pred_fallthru
          _
      $region12: #{tpu_custom_call.1} parent=5 // pred_fallthru
        _
      %p189 = scmp.lt.s32.totalorder %s11, 8
      // Predicated region
      $region17: #{tpu_custom_call.1} parent=5 // pred_check
        %p190 = pneg %p189
      $region18: #{tpu_custom_call.1} parent=5 // pred_check_branch
        %192 = sbr.rel (%p190) target = $region20
      $region19: #{tpu_custom_call.1} parent=5 // pred_region
        // Predicated region
        $region21: #{tpu_custom_call.1} parent=19 // pred_check
          %p193 = pneg %p50
        $region22: #{tpu_custom_call.1} parent=19 // pred_check_branch
          %195 = sbr.rel (%p193) target = $region24
        $region23: #{tpu_custom_call.1} parent=19 // pred_region
          %p196 = scmp.lt.s32.totalorder %s18, 1
          %s197 = scalar_select %p196, %s18, 1
          %s198 = scalar_lea.vmem %s0, %s197
        $region24: #{tpu_custom_call.1} parent=19 // pred_fallthru
          _
        // Predicated region
        $region25: #{tpu_custom_call.1} parent=19 // pred_check
          %p199 = pneg %p76
        $region26: #{tpu_custom_call.1} parent=19 // pred_check_branch
          %201 = sbr.rel (%p199) target = $region28
        $region27: #{tpu_custom_call.1} parent=19 // pred_region
          %p202 = scmp.lt.s32.totalorder %s18, 1
          %s203 = scalar_select %p202, %s18, 1
          %s204 = smul.addr %s203, 2
          %s205 = smul.addr %s204, 8
          %s206 = scalar_lea.vmem %s1, %s205
        $region28: #{tpu_custom_call.1} parent=19 // pred_fallthru
          _
        // Predicated region
        $region29: #{tpu_custom_call.1} parent=19 // pred_check
          %p207 = pneg %p108
        $region30: #{tpu_custom_call.1} parent=19 // pred_check_branch
          %209 = sbr.rel (%p207) target = $region32
        $region31: #{tpu_custom_call.1} parent=19 // pred_region
          %s210 = smul.u32 %s19, 2
          %s211 = sadd.s32 %s210, %s20
          %s212 = smul.u32 2, %s211
          %p213 = scmp.lt.s32.totalorder %s18, 1
          %s214 = scalar_select %p213, %s18, 1
          %p215 = scmp.lt.s32.totalorder %s212, 7
          %s216 = scalar_select %p215, %s212, 7
          %s217 = smul.addr %s216, 2
          %s218 = smul.addr %s214, 16
          %s219 = sadd.s32 %s217, %s218
          %s220 = smul.addr %s219, 8
          %s221 = scalar_lea.vmem %s2, %s220
          %s222 = smul.u32 %s19, 2
          %s223 = sadd.s32 %s222, %s20
          %s224 = smul.u32 2, %s223
        $region32: #{tpu_custom_call.1} parent=19 // pred_fallthru
          _
      $region20: #{tpu_custom_call.1} parent=5 // pred_fallthru
        _
      %p225 = scmp.le.s32.totalorder 1, %s11
      %p226 = scmp.lt.s32.totalorder %s11, 9
      %p227 = pnand %p225, %p226
      %p228 = pneg %p227
      // Predicated region
      $region33: #{tpu_custom_call.1} parent=5 // pred_check
        _
      $region34: #{tpu_custom_call.1} parent=5 // pred_check_branch
        %230 = sbr.rel (%p227) target = $region36
      $region35: #{tpu_custom_call.1} parent=5 // pred_region
        %s231 = ssub.s32 %s11, 1
        // Predicated region
        $region37: #{tpu_custom_call.1} parent=35 // pred_check
          %p232 = pneg %p135
        $region38: #{tpu_custom_call.1} parent=35 // pred_check_branch
          %234 = sbr.rel (%p232) target = $region40
        $region39: #{tpu_custom_call.1} parent=35 // pred_region
          %235 = dma.done [#allocation6], 16
        $region40: #{tpu_custom_call.1} parent=35 // pred_fallthru
          _
        %236 = sfence
        %p237 = scmp.lt.s32.totalorder %s21, 1
        %s238 = scalar_select %p237, %s21, 1
        %s239 = scalar_lea.vmem %s0, %s238
        %p240 = pneg %p56
        %p241 = pneg %p53
        %p242 = scmp.lt.s32.totalorder %s21, 1
        %s243 = scalar_select %p242, %s21, 1
        %s244 = smul.addr %s243, 2
        %s245 = smul.addr %s244, 8
        %s246 = scalar_lea.vmem %s1, %s245
        %p247 = pneg %p82
        %p248 = pneg %p79
        %s249 = smul.u32 %s22, 2
        %s250 = sadd.s32 %s249, %s23
        %s251 = smul.u32 2, %s250
        %p252 = scmp.lt.s32.totalorder %s21, 1
        %s253 = scalar_select %p252, %s21, 1
        %p254 = scmp.lt.s32.totalorder %s251, 7
        %s255 = scalar_select %p254, %s251, 7
        %s256 = smul.addr %s255, 2
        %s257 = smul.addr %s253, 16
        %s258 = sadd.s32 %s256, %s257
        %s259 = smul.addr %s258, 8
        %s260 = scalar_lea.vmem %s2, %s259
        %p261 = pneg %p114
        %p262 = pneg %p111
        %p263 = pneg %p135
        %p264 = pneg %p132
        %p265 = pneg %p163
        %p266 = pneg %p160
        %p267 = scmp.lt.s32.totalorder %s21, 1
        %s268 = scalar_select %p267, %s21, 1
        %p269 = scmp.lt.s32.totalorder %s22, 1
        %s270 = scalar_select %p269, %s22, 1
        %s271 = smul.addr %s270, 2
        %s272 = smul.addr %s268, 4
        %s273 = sadd.s32 %s271, %s272
        %s274 = smul.addr %s273, 8
        %s275 = scalar_lea.vmem %s4, %s274
        %p276 = scmp.lt.s32.totalorder %s21, 1
        %s277 = scalar_select %p276, %s21, 1
        %s278 = scalar_lea.vmem %s0, %s277
        %p279 = scmp.lt.s32.totalorder %s21, 1
        %s280 = scalar_select %p279, %s21, 1
        %s281 = smul.addr %s280, 2
        %s282 = smul.addr %s281, 8
        %s283 = scalar_lea.vmem %s1, %s282
        %s284 = smul.u32 %s22, 2
        %s285 = sadd.s32 %s284, %s23
        %s286 = smul.u32 2, %s285
        %p287 = scmp.lt.s32.totalorder %s21, 1
        %s288 = scalar_select %p287, %s21, 1
        %p289 = scmp.lt.s32.totalorder %s286, 7
        %s290 = scalar_select %p289, %s286, 7
        %s291 = smul.addr %s290, 2
        %s292 = smul.addr %s288, 16
        %s293 = sadd.s32 %s291, %s292
        %s294 = smul.addr %s293, 8
        %s295 = scalar_lea.vmem %s2, %s294
        %s296 = smul.u32 %s22, 2
        %s297 = sadd.s32 %s296, %s23
        %s298 = smul.u32 2, %s297
        %p299 = scmp.lt.s32.totalorder %s21, 1
        %s300 = scalar_select %p299, %s21, 1
        %p301 = scmp.lt.s32.totalorder %s22, 1
        %s302 = scalar_select %p301, %s22, 1
        %s303 = smul.addr %s302, 2
        %s304 = smul.addr %s300, 4
        %s305 = sadd.s32 %s303, %s304
        %s306 = smul.addr %s305, 8
        %s307 = scalar_lea.vmem %s4, %s306
        %p308 = scmp.eq.s32.totalorder %s23, 0
        // Predicated region
        $region41: #{tpu_custom_call.1} parent=35 // pred_check
          %p309 = pneg %p308
        $region42: #{tpu_custom_call.1} parent=35 // pred_check_branch
          %311 = sbr.rel (%p309) target = $region44
        $region43: #{tpu_custom_call.1} parent=35 // pred_region
          %vm312 = vcmask 80896
          %313 = vst.msk [vmem:[#allocation2] sm:$0xff] %vm312, 0.0
          %vm314 = vcmask 74752
          %315 = vst.msk [vmem:[#allocation2 + $0x8] sm:$0x3] %vm314, 0.0
        $region44: #{tpu_custom_call.1} parent=35 // pred_fallthru
          _
        %v316 = vld [vmem:[%s278] sm:$0x1]
        %v317 = vld [vmem:[%s283] sm:$0xff]
        %v318 = vld [vmem:[%s283 + $0x8] sm:$0x3]
        %s319 = smul.u32 %s23, 2
        %s320 = smul.u32 %s22, 4
        %s321 = sadd.s32 %s320, %s319
        %s322 = sld [smem:[#allocation5 + %s321]]
        %v323 = vld [vmem:[%s295] sm:$0xff]
        %v324 = vld [vmem:[%s295 + $0x8] sm:$0x3]
        %v325 = vld [vmem:[#allocation2] sm:$0xff]
        %v326 = vld [vmem:[#allocation2 + $0x8] sm:$0x3]
        %v327 = vstv %s322
        %v328 = vmul.f32 %v327, %v323
        %v329 = vmul.f32 %v327, %v324
        %v330 = vadd.f32 %v325, %v328
        %v331 = vadd.f32 %v326, %v329
        %vm332 = vcmask 80896
        %333 = vst.msk [vmem:[#allocation2] sm:$0xff] %vm332, %v330
        %vm334 = vcmask 74752
        %335 = vst.msk [vmem:[#allocation2 + $0x8] sm:$0x3] %vm334, %v331
        %v337 = vlaneseq
        %v338 = vshrl.u32 %v337, 7
        %v339 = vsub.s32 0, %v338
        %v340 = vrot.slane %v316, %v339
        %v342 = vmul.f32 %v323, %v340
        %v343 = vmul.f32 %v324, %v340
        %v344 = vsel %vm332, %v342, 0.0
        %345 = vadd.xlane.f32.xlu0 %v344
        %v346 = vpop.xlane.xlu0 %345
        %v347 = vsel %vm334, %v343, 0.0
        %348 = vadd.xlane.f32.xlu0 %v347
        %v349 = vpop.xlane.xlu0 %348
        %351 = vset.pattern.permute.xlu0 0
        %352 = vperm.xlu0 %351, %v317
        %v353 = vpop.permute.xlu0 %352
        %356 = vset.pattern.permute.xlu0 0
        %357 = vperm.xlu0 %356, %v318
        %v358 = vpop.permute.xlu0 %357
        %v360 = vmul.f32 %v323, %v353
        %v361 = vmul.f32 %v324, %v358
        %v362 = vsel %vm332, %v360, 0.0
        %v363 = vsel %vm334, %v361, 0.0
        %v364 = vadd.f32 %v362, %v363
        %v365 = vrot.slane %v364, 4
        %v366 = vadd.f32 %v364, %v365
        %v367 = vrot.slane %v366, 2
        %v368 = vadd.f32 %v366, %v367
        %v369 = vrot.slane %v368, 1
        %v370 = vadd.f32 %v368, %v369
        %371 = vxpose.xlu0.b32.start [1/16] %v346, 128
        %372 = vxpose.xlu0.b32.cont [2/16] %v349, 128
        %373 = vxpose.xlu0.b32.cont [3/16] 0.0, 128
        %374 = vxpose.xlu0.b32.cont [4/16] 0.0, 128
        %375 = vxpose.xlu0.b32.cont [5/16] 0.0, 128
        %376 = vxpose.xlu0.b32.cont [6/16] 0.0, 128
        %377 = vxpose.xlu0.b32.cont [7/16] 0.0, 128
        %378 = vxpose.xlu0.b32.cont [8/16] 0.0, 128
        %379 = vxpose.xlu0.b32.cont [9/16] 0.0, 128
        %380 = vxpose.xlu0.b32.cont [10/16] 0.0, 128
        %381 = vxpose.xlu0.b32.cont [11/16] 0.0, 128
        %382 = vxpose.xlu0.b32.cont [12/16] 0.0, 128
        %383 = vxpose.xlu0.b32.cont [13/16] 0.0, 128
        %384 = vxpose.xlu0.b32.cont [14/16] 0.0, 128
        %385 = vxpose.xlu0.b32.cont [15/16] 0.0, 128
        %386 = vxpose.xlu0.b32.end [16/16] 0.0, 128
        %v387 = vpop.trf.xlu0
        %v388 = vpop.trf.xlu0
        %v389 = vpop.trf.xlu0
        %v390 = vpop.trf.xlu0
        %v391 = vpop.trf.xlu0
        %v392 = vpop.trf.xlu0
        %v393 = vpop.trf.xlu0
        %v394 = vpop.trf.xlu0
        %v395 = vpop.trf.xlu0
        %v396 = vpop.trf.xlu0
        %v397 = vpop.trf.xlu0
        %v398 = vpop.trf.xlu0
        %v399 = vpop.trf.xlu0
        %v400 = vpop.trf.xlu0
        %v401 = vpop.trf.xlu0
        %v402 = vpop.trf.xlu0
        %v403 = vadd.f32 %v387, %v370
        %v404 = vmul.f32 %v403, %v316
        %vm405 = vcmask 73728
        %v406 = vsel %vm405, %v404, 0.0
        %407 = vadd.xlane.f32.xlu0 %v406
        %v408 = vpop.xlane.xlu0 %407
        %v409 = vrot.slane %v408, 4
        %v410 = vadd.f32 %v408, %v409
        %v411 = vrot.slane %v410, 2
        %v412 = vadd.f32 %v410, %v411
        %v413 = vrot.slane %v412, 1
        %v414 = vadd.f32 %v412, %v413
        %s415 = vtos %v414
        %p416 = scmp.ne.f32.partialorder %s415, 0.0
        %s417 = scalar_select %p416, %s415, 1.0
        %s418 = scalar_lea.vmem [#allocation3], %s319
        %419 = vst.msk [vmem:[%s418] sm:$0x1] %vm405, %v404
        %v420 = vstv %s417
        %v421 = vrcp.pop %v420
        %s422 = vtos %v421
        %s423 = smul.f32 %s322, %s422
        %v424 = vstv %s423
        %v425 = vmul.f32 %v424, %v404
        %s426 = scalar_lea.vmem [#allocation4], %s319
        %427 = vst.msk [vmem:[%s426] sm:$0x1] %vm405, %v425
        %s428 = sadd.s32 %s319, 1
        %s429 = sadd.s32 %s320, %s428
        %s430 = sld [smem:[#allocation5 + %s429]]
        %s431 = scalar_lea.vmem %s295, 16
        %v432 = vld [vmem:[%s431] sm:$0xff]
        %v433 = vld [vmem:[%s431 + $0x8] sm:$0x3]
        %v434 = vld [vmem:[#allocation2] sm:$0xff]
        %v435 = vld [vmem:[#allocation2 + $0x8] sm:$0x3]
        %v436 = vstv %s430
        %v437 = vmul.f32 %v436, %v432
        %v438 = vmul.f32 %v436, %v433
        %v439 = vadd.f32 %v434, %v437
        %v440 = vadd.f32 %v435, %v438
        %441 = vst.msk [vmem:[#allocation2] sm:$0xff] %vm332, %v439
        %442 = vst.msk [vmem:[#allocation2 + $0x8] sm:$0x3] %vm334, %v440
        %v443 = vmul.f32 %v432, %v340
        %v444 = vmul.f32 %v433, %v340
        %v445 = vsel %vm332, %v443, 0.0
        %446 = vadd.xlane.f32.xlu0 %v445
        %v447 = vpop.xlane.xlu0 %446
        %v448 = vsel %vm334, %v444, 0.0
        %449 = vadd.xlane.f32.xlu0 %v448
        %v450 = vpop.xlane.xlu0 %449
        %v451 = vmul.f32 %v432, %v353
        %v452 = vmul.f32 %v433, %v358
        %v453 = vsel %vm332, %v451, 0.0
        %v454 = vsel %vm334, %v452, 0.0
        %v455 = vadd.f32 %v453, %v454
        %v456 = vrot.slane %v455, 4
        %v457 = vadd.f32 %v455, %v456
        %v458 = vrot.slane %v457, 2
        %v459 = vadd.f32 %v457, %v458
        %v460 = vrot.slane %v459, 1
        %v461 = vadd.f32 %v459, %v460
        %462 = vxpose.xlu0.b32.start [1/16] %v447, 128
        %463 = vxpose.xlu0.b32.cont [2/16] %v450, 128
        %464 = vxpose.xlu0.b32.cont [3/16] 0.0, 128
        %465 = vxpose.xlu0.b32.cont [4/16] 0.0, 128
        %466 = vxpose.xlu0.b32.cont [5/16] 0.0, 128
        %467 = vxpose.xlu0.b32.cont [6/16] 0.0, 128
        %468 = vxpose.xlu0.b32.cont [7/16] 0.0, 128
        %469 = vxpose.xlu0.b32.cont [8/16] 0.0, 128
        %470 = vxpose.xlu0.b32.cont [9/16] 0.0, 128
        %471 = vxpose.xlu0.b32.cont [10/16] 0.0, 128
        %472 = vxpose.xlu0.b32.cont [11/16] 0.0, 128
        %473 = vxpose.xlu0.b32.cont [12/16] 0.0, 128
        %474 = vxpose.xlu0.b32.cont [13/16] 0.0, 128
        %475 = vxpose.xlu0.b32.cont [14/16] 0.0, 128
        %476 = vxpose.xlu0.b32.cont [15/16] 0.0, 128
        %477 = vxpose.xlu0.b32.end [16/16] 0.0, 128
        %v478 = vpop.trf.xlu0
        %v479 = vpop.trf.xlu0
        %v480 = vpop.trf.xlu0
        %v481 = vpop.trf.xlu0
        %v482 = vpop.trf.xlu0
        %v483 = vpop.trf.xlu0
        %v484 = vpop.trf.xlu0
        %v485 = vpop.trf.xlu0
        %v486 = vpop.trf.xlu0
        %v487 = vpop.trf.xlu0
        %v488 = vpop.trf.xlu0
        %v489 = vpop.trf.xlu0
        %v490 = vpop.trf.xlu0
        %v491 = vpop.trf.xlu0
        %v492 = vpop.trf.xlu0
        %v493 = vpop.trf.xlu0
        %v494 = vadd.f32 %v478, %v461
        %v495 = vmul.f32 %v494, %v316
        %v496 = vsel %vm405, %v495, 0.0
        %497 = vadd.xlane.f32.xlu0 %v496
        %v498 = vpop.xlane.xlu0 %497
        %v499 = vrot.slane %v498, 4
        %v500 = vadd.f32 %v498, %v499
        %v501 = vrot.slane %v500, 2
        %v502 = vadd.f32 %v500, %v501
        %v503 = vrot.slane %v502, 1
        %v504 = vadd.f32 %v502, %v503
        %s505 = vtos %v504
        %p506 = scmp.ne.f32.partialorder %s505, 0.0
        %s507 = scalar_select %p506, %s505, 1.0
        %s508 = scalar_lea.vmem [#allocation3], %s428
        %509 = vst.msk [vmem:[%s508] sm:$0x1] %vm405, %v495
        %v510 = vstv %s507
        %v511 = vrcp.pop %v510
        %s512 = vtos %v511
        %s513 = smul.f32 %s430, %s512
        %v514 = vstv %s513
        %v515 = vmul.f32 %v514, %v495
        %s516 = scalar_lea.vmem [#allocation4], %s428
        %517 = vst.msk [vmem:[%s516] sm:$0x1] %vm405, %v515
        %p518 = scmp.eq.s32.totalorder %s23, 1
        // Predicated region
        $region45: #{tpu_custom_call.1} parent=35 // pred_check
          %p519 = pneg %p518
        $region46: #{tpu_custom_call.1} parent=35 // pred_check_branch
          %521 = sbr.rel (%p519) target = $region48
        $region47: #{tpu_custom_call.1} parent=35 // pred_region
          %v522 = vld [vmem:[#allocation2] sm:$0xff]
          %v523 = vld [vmem:[#allocation2 + $0x8] sm:$0x3]
          %524 = vxpose.xlu0.b32.start [1/16] %v522, 128
          %525 = vxpose.xlu0.b32.cont [2/16] %v523, 128
          %526 = vxpose.xlu0.b32.cont [3/16] 0.0, 128
          %527 = vxpose.xlu0.b32.cont [4/16] 0.0, 128
          %528 = vxpose.xlu0.b32.cont [5/16] 0.0, 128
          %529 = vxpose.xlu0.b32.cont [6/16] 0.0, 128
          %530 = vxpose.xlu0.b32.cont [7/16] 0.0, 128
          %531 = vxpose.xlu0.b32.cont [8/16] 0.0, 128
          %532 = vxpose.xlu0.b32.cont [9/16] 0.0, 128
          %533 = vxpose.xlu0.b32.cont [10/16] 0.0, 128
          %534 = vxpose.xlu0.b32.cont [11/16] 0.0, 128
          %535 = vxpose.xlu0.b32.cont [12/16] 0.0, 128
          %536 = vxpose.xlu0.b32.cont [13/16] 0.0, 128
          %537 = vxpose.xlu0.b32.cont [14/16] 0.0, 128
          %538 = vxpose.xlu0.b32.cont [15/16] 0.0, 128
          %539 = vxpose.xlu0.b32.end [16/16] 0.0, 128
          %v540 = vpop.trf.xlu0
          %v541 = vpop.trf.xlu0
          %v542 = vpop.trf.xlu0
          %v543 = vpop.trf.xlu0
          %v544 = vpop.trf.xlu0
          %v545 = vpop.trf.xlu0
          %v546 = vpop.trf.xlu0
          %v547 = vpop.trf.xlu0
          %v548 = vpop.trf.xlu0
          %v549 = vpop.trf.xlu0
          %v550 = vpop.trf.xlu0
          %v551 = vpop.trf.xlu0
          %v552 = vpop.trf.xlu0
          %v553 = vpop.trf.xlu0
          %v554 = vpop.trf.xlu0
          %v555 = vpop.trf.xlu0
          %v556 = vadd.f32 %v522, %v540
          %v557 = vadd.f32 %v523, %v541
          %v558 = vmul.f32 %v556, %v340
          %v559 = vmul.f32 %v557, %v340
          %v560 = vmul.f32 %v558, %v353
          %v561 = vmul.f32 %v559, %v358
          %v562 = vld [vmem:[#allocation3] sm:$0xf]
          %v563 = vld [vmem:[#allocation4] sm:$0xf]
          %564 = vxpose.xlu0.b32.start [1/16] %v562, 128
          %565 = vxpose.xlu0.b32.cont [2/16] 0.0, 128
          %566 = vxpose.xlu0.b32.cont [3/16] 0.0, 128
          %567 = vxpose.xlu0.b32.cont [4/16] 0.0, 128
          %568 = vxpose.xlu0.b32.cont [5/16] 0.0, 128
          %569 = vxpose.xlu0.b32.cont [6/16] 0.0, 128
          %570 = vxpose.xlu0.b32.cont [7/16] 0.0, 128
          %571 = vxpose.xlu0.b32.cont [8/16] 0.0, 128
          %572 = vxpose.xlu0.b32.cont [9/16] 0.0, 128
          %573 = vxpose.xlu0.b32.cont [10/16] 0.0, 128
          %574 = vxpose.xlu0.b32.cont [11/16] 0.0, 128
          %575 = vxpose.xlu0.b32.cont [12/16] 0.0, 128
          %576 = vxpose.xlu0.b32.cont [13/16] 0.0, 128
          %577 = vxpose.xlu0.b32.cont [14/16] 0.0, 128
          %578 = vxpose.xlu0.b32.cont [15/16] 0.0, 128
          %579 = vxpose.xlu0.b32.end [16/16] 0.0, 128
          %v580 = vpop.trf.xlu0
          %v581 = vpop.trf.xlu0
          %v582 = vpop.trf.xlu0
          %v583 = vpop.trf.xlu0
          %v584 = vpop.trf.xlu0
          %v585 = vpop.trf.xlu0
          %v586 = vpop.trf.xlu0
          %v587 = vpop.trf.xlu0
          %v588 = vpop.trf.xlu0
          %v589 = vpop.trf.xlu0
          %v590 = vpop.trf.xlu0
          %v591 = vpop.trf.xlu0
          %v592 = vpop.trf.xlu0
          %v593 = vpop.trf.xlu0
          %v594 = vpop.trf.xlu0
          %v595 = vpop.trf.xlu0
          %vm596 = vcmask 31744
          %v598 = vsel %vm596, %v580, 0
          %v601 = vsel %vm596, %v581, 0
          %vm603 = vcmask 1043456
          %v605 = vsel %vm603, %v563, 0
          %607 = vmatprep.subr.mxu0 0.0
          %608 = vmatpush1.msra.mxu0 %v605
          %609 = vmatprep.subr.mxu0 0.0
          %610 = vmatpush1.msra.mxu0 0.0
          %611 = vmatprep.subr.mxu0 0.0
          %612 = vmatpush1.msra.mxu0 0.0
          %613 = vmatprep.subr.mxu0 0.0
          %614 = vmatpush1.msra.mxu0 0.0
          %615 = vmatprep.subr.mxu0 0.0
          %616 = vmatpush1.msra.mxu0 0.0
          %617 = vmatprep.subr.mxu0 0.0
          %618 = vmatpush1.msra.mxu0 0.0
          %619 = vmatprep.subr.mxu0 0.0
          %620 = vmatpush1.msra.mxu0 0.0
          %621 = vmatprep.subr.mxu0 0.0
          %622 = vmatpush1.msra.mxu0 0.0
          %623 = vmatprep.subr.mxu0 0.0
          %624 = vmatpush1.msra.mxu0 0.0
          %625 = vmatprep.subr.mxu0 0.0
          %626 = vmatpush1.msra.mxu0 0.0
          %627 = vmatprep.subr.mxu0 0.0
          %628 = vmatpush1.msra.mxu0 0.0
          %629 = vmatprep.subr.mxu0 0.0
          %630 = vmatpush1.msra.mxu0 0.0
          %631 = vmatprep.subr.mxu0 0.0
          %632 = vmatpush1.msra.mxu0 0.0
          %633 = vmatprep.subr.mxu0 0.0
          %634 = vmatpush1.msra.mxu0 0.0
          %635 = vmatprep.subr.mxu0 0.0
          %636 = vmatpush1.msra.mxu0 0.0
          %637 = vmatprep.subr.mxu0 0.0
          %638 = vmatpush1.msra.mxu0 0.0
          %639 = vmatprep.subr.mxu0 0.0
          %640 = vmatpush1.msra.mxu0 0.0
          %641 = vmatprep.subr.mxu0 0.0
          %642 = vmatpush1.msra.mxu0 0.0
          %643 = vmatprep.subr.mxu0 0.0
          %644 = vmatpush1.msra.mxu0 0.0
          %645 = vmatprep.subr.mxu0 0.0
          %646 = vmatpush1.msra.mxu0 0.0
          %647 = vmatprep.subr.mxu0 0.0
          %648 = vmatpush1.msra.mxu0 0.0
          %649 = vmatprep.subr.mxu0 0.0
          %650 = vmatpush1.msra.mxu0 0.0
          %651 = vmatprep.subr.mxu0 0.0
          %652 = vmatpush1.msra.mxu0 0.0
          %653 = vmatprep.subr.mxu0 0.0
          %654 = vmatpush1.msra.mxu0 0.0
          %655 = vmatprep.subr.mxu0 0.0
          %656 = vmatpush1.msra.mxu0 0.0
          %657 = vmatprep.subr.mxu0 0.0
          %658 = vmatpush1.msra.mxu0 0.0
          %659 = vmatprep.subr.mxu0 0.0
          %660 = vmatpush1.msra.mxu0 0.0
          %661 = vmatprep.subr.mxu0 0.0
          %662 = vmatpush1.msra.mxu0 0.0
          %663 = vmatprep.subr.mxu0 0.0
          %664 = vmatpush1.msra.mxu0 0.0
          %665 = vmatprep.subr.mxu0 0.0
          %666 = vmatpush1.msra.mxu0 0.0
          %667 = vmatprep.subr.mxu0 0.0
          %668 = vmatpush1.msra.mxu0 0.0
          %669 = vmatprep.subr.mxu0 0.0
          %670 = vmatpush1.msra.mxu0 0.0
          %671 = vmatprep.mubr.f32.mxu0 0.0
          %672 = vmatmul.mubr.f32.gmra.mrb[0].mxu0 %v598
          %v673 = vpop.f32.mrb[0].mxu0
          %v674 = vadd.f32 0.0, %v673
          %v675 = vpop.f32.mrb[0].mxu0
          %676 = vmatprep.mubr.f32.mxu0 0.0
          %677 = vmatmul.mubr.f32.gmra.mrb[0].mxu0 %v601
          %v678 = vpop.f32.mrb[0].mxu0
          %v679 = vadd.f32 0.0, %v678
          %v680 = vpop.f32.mrb[0].mxu0
          %681 = vdwg.mxu0
          %v682 = vsub.f32 %v560, %v674
          %v683 = vsub.f32 %v561, %v679
          %684 = vst.msk [vmem:[%s307] sm:$0xff] %vm332, %v682
          %685 = vst.msk [vmem:[%s307 + $0x8] sm:$0x3] %vm334, %v683
        $region48: #{tpu_custom_call.1} parent=35 // pred_fallthru
          _
        %p686 = scmp.lt.s32.totalorder %s21, 1
        %s687 = scalar_select %p686, %s21, 1
        %p688 = scmp.lt.s32.totalorder %s22, 1
        %s689 = scalar_select %p688, %s22, 1
        %s690 = smul.addr %s689, 2
        %s691 = smul.addr %s687, 4
        %s692 = sadd.s32 %s690, %s691
        %s693 = smul.addr %s692, 8
        %s694 = scalar_lea.vmem %s4, %s693
        // Predicated region
        $region49: #{tpu_custom_call.1} parent=35 // pred_check
          %p695 = pneg %p160
        $region50: #{tpu_custom_call.1} parent=35 // pred_check_branch
          %697 = sbr.rel (%p695) target = $region52
        $region51: #{tpu_custom_call.1} parent=35 // pred_region
          _
        $region52: #{tpu_custom_call.1} parent=35 // pred_fallthru
          _
      $region36: #{tpu_custom_call.1} parent=5 // pred_fallthru
        _
      %p698 = scmp.le.s32.totalorder 2, %s11
      // Predicated region
      $region53: #{tpu_custom_call.1} parent=5 // pred_check
        %p699 = pneg %p698
      $region54: #{tpu_custom_call.1} parent=5 // pred_check_branch
        %701 = sbr.rel (%p699) target = $region56
      $region55: #{tpu_custom_call.1} parent=5 // pred_region
        %s702 = ssub.s32 %s11, 2
        // Predicated region
        $region57: #{tpu_custom_call.1} parent=55 // pred_check
          %p703 = pneg %p166
        $region58: #{tpu_custom_call.1} parent=55 // pred_check_branch
          %705 = sbr.rel (%p703) target = $region60
        $region59: #{tpu_custom_call.1} parent=55 // pred_region
          %p706 = scmp.lt.s32.totalorder %s24, 1
          %s707 = scalar_select %p706, %s24, 1
          %p708 = scmp.lt.s32.totalorder %s25, 1
          %s709 = scalar_select %p708, %s25, 1
          %s710 = smul.addr %s709, 2
          %s711 = smul.addr %s707, 4
          %s712 = sadd.s32 %s710, %s711
          %s713 = smul.addr %s712, 8
          %s714 = scalar_lea.vmem %s4, %s713
        $region60: #{tpu_custom_call.1} parent=55 // pred_fallthru
          _
      $region56: #{tpu_custom_call.1} parent=5 // pred_fallthru
        _
    $region6: #{tpu_custom_call.1} parent=1 // loop_footer
      %s15 = sadd.s32 1, %s11
    $region7: #{tpu_custom_call.1} parent=1 // loop_footer_branch
      %10 = sbr.rel target = $region3
    $region8: #{tpu_custom_call.1} parent=1 // loop_exit
      _
    %715 = vsyncpa [#allocation6], 1
    %s716 = scalar_lea.sflag [#allocation6], 1
    %717 = vsyncpa %s716, 1

</llo_original>
